<compile_context>
chip_gen: v7x
topology: tpu7x:2x2x1
jax: 0.10.0
libtpu: 0.0.40
codegen_flags: <defaults>
</compile_context>

<pallas_src>
import math
from functools import lru_cache, partial

import jax
import jax.numpy as jnp
from jax.experimental import pallas as pl
from jax.experimental.pallas import tpu as pltpu

_LANE = 128
_SUBLANE = 8
_SMALL_BYTES = 512 * 1024        # below this: one block, no grid (per-step cost dominates)
_SLAB_TARGET = 2 * 1024 * 1024   # ~1-3 MiB slabs already sit near the HBM roofline
_MIN_STEPS = 4                   # prefer >= 4 grid steps (pipelining + 2 TCs on v7x)


@lru_cache(maxsize=1)
def _vmem_capacity_bytes():
    try:
        return int(pltpu.get_tpu_info().vmem_capacity_bytes)
    except Exception:
        return 64 * 1024 * 1024          # conservative default: v7x per-TensorCore VMEM


def _group_axes(shape, perm):
    """Merge runs of input axes that remain adjacent & in-order under `perm`.

    Returns (grouped_in_shape, grouped_perm); reshaping to the grouped shape is
    a free row-major relabeling.
    """
    runs = []
    for p in perm:
        if runs and p == runs[-1][-1] + 1:
            runs[-1].append(p)
        else:
            runs.append([p])
    groups = sorted(runs, key=lambda g: g[0])                 # groups in input order
    g_in_shape = tuple(int(math.prod([shape[a] for a in g])) for g in groups)
    first_to_idx = {g[0]: i for i, g in enumerate(groups)}
    g_perm = tuple(first_to_idx[r[0]] for r in runs)
    return g_in_shape, g_perm


def _dense_view(t):
    """Row-major relabeling of the transposed shape `t` whose last dim is a
    multiple of 128 when possible (=> unmasked, full-width vst on store).
    Returns `t` unchanged when no reshape is needed (or none can help)."""
    t = tuple(int(d) for d in t)
    if not t or t[-1] >= _LANE:
        return t                           # already lane-dense: no in-kernel reshape
    total = int(math.prod(t))
    if total < _LANE:
        return t                           # too small to fill one lane row
    if total % _LANE == 0:
        return (total // _LANE, _LANE)     # fully dense lanes; rows on the sublane axis
    cols = 1
    for k in range(len(t) - 1, -1, -1):    # smallest trailing merge reaching >= 128 lanes
        cols *= t[k]
        if cols >= _LANE:
            return (total // cols, cols)   # tail vst masked, but >= 128 lanes per row
    return t


def _permute_kernel(g_perm, x_ref, o_ref):
    y = jnp.transpose(x_ref[...], g_perm)
    if y.shape != o_ref.shape:
        # Merge minor dims so the store writes full 128-lane rows.  This is an
        # in-VMEM relayout; its lowerability is checked once per signature.
        y = y.reshape(o_ref.shape)
    o_ref[...] = y


def _build_single(g_in_shape, dtype, g_perm, out_view, vmem_limit):
    """Whole array as one block, no grid (tiny / un-tileable inputs)."""
    return pl.pallas_call(
        partial(_permute_kernel, g_perm),
        out_shape=jax.ShapeDtypeStruct(tuple(out_view), dtype),
        compiler_params=pltpu.CompilerParams(vmem_limit_bytes=vmem_limit),
    )


def _build_tiled(g_in_shape, dtype, g_perm, item_view, bn, steps, vmem_limit):
    """Grid over the leading *output* group (input axis j = g_perm[0]); the
    permuted source block position is expressed in the input index_map."""
    n = len(g_in_shape)
    j = g_perm[0]
    G = g_in_shape[j]
    in_block = tuple(bn if d == j else g_in_shape[d] for d in range(n))
    out_view = (G,) + tuple(item_view)
    out_block = (bn,) + tuple(item_view)
    out_nd = len(out_view)

    def in_index_map(i, _j=j, _n=n):
        return tuple(i if d == _j else 0 for d in range(_n))

    def out_index_map(i, _m=out_nd):
        return (i,) + (0,) * (_m - 1)

    fn = pl.pallas_call(
        partial(_permute_kernel, g_perm),
        out_shape=jax.ShapeDtypeStruct(out_view, dtype),
        grid=(steps,),
        in_specs=[pl.BlockSpec(in_block, in_index_map)],
        out_specs=pl.BlockSpec(out_block, out_index_map),
        compiler_params=pltpu.CompilerParams(
            dimension_semantics=("parallel",),      # shard grid steps across TensorCores
            vmem_limit_bytes=vmem_limit),
    )
    return fn, out_view


def _bn_alignment(n_in_dims, j, item_view):
    """(8,128) block constraint: alignment the tiled block size bn must honor."""
    a_in = 1
    if j == n_in_dims - 1:
        a_in = _LANE                       # tiled axis is the input's lane dim
    elif j == n_in_dims - 2:
        a_in = _SUBLANE                    # tiled axis is the input's sublane dim
    a_out = _SUBLANE if len(item_view) == 1 else 1   # out view (G, cols): G is sublane dim
    return max(a_in, a_out)


def _pick_bn(G, per_item_bytes, align, vmem_cap):
    """Largest divisor of G (multiple of `align`) giving ~1-3 MiB slabs with
    >= _MIN_STEPS grid steps; relaxed to >= 2 steps under the double-buffered
    working budget.  None => no useful tiling (caller falls back)."""
    work_budget = min(24 << 20, max(vmem_cap - (8 << 20), 8 << 20))
    divs = set()
    i = 1
    while i * i <= G:
        if G % i == 0:
            divs.add(i)
            divs.add(G // i)
        i += 1
    divisors = sorted((d for d in divs if d % align == 0), reverse=True)
    for d in divisors:
        if d * per_item_bytes <= _SLAB_TARGET and G // d >= _MIN_STEPS:
            return d
    for d in divisors:
        if 4 * d * per_item_bytes <= work_budget and G // d >= 2:
            return d
    return None


@lru_cache(maxsize=None)
def _merged_store_lowers(kind, g_in_shape, dtype_name, g_perm, view, bn, steps,
                         vmem_limit):
    """One-time (per static signature) AOT-compile check that the lane-dense
    (minor-merged) store layout lowers on this Mosaic build.  Cached, so it
    never runs on the hot path; a failure statically selects the un-merged
    (transpose-only) store layout instead."""
    dtype = jnp.dtype(dtype_name)
    try:
        if kind == "single":
            fn = _build_single(g_in_shape, dtype, g_perm, view, vmem_limit)
        else:
            fn, _ = _build_tiled(g_in_shape, dtype, g_perm, view, bn, steps,
                                 vmem_limit)
        jax.jit(fn).lower(jax.ShapeDtypeStruct(g_in_shape, dtype)).compile()
        return True
    except Exception:
        return False


def permuted_in_spec(perm, out_block_shape, out_index_map):
    """Fuse a permute into a consumer kernel (no standalone HBM roundtrip):
    given the consumer's block shape / index_map expressed in *permuted*
    (output) coordinates, return the pl.BlockSpec that reads the matching block
    straight from the un-permuted source array.  The loaded block arrives in
    source axis order; the consumer applies jnp.transpose(block, perm)
    in-kernel (VMEM-local)."""
    perm = tuple(int(p) for p in perm)
    n = len(perm)
    inv = [0] * n
    for a, p in enumerate(perm):
        inv[p] = a
    src_block_shape = tuple(out_block_shape[inv[b]] for b in range(n))

    def src_index_map(*args):
        out_idx = out_index_map(*args)
        return tuple(out_idx[inv[b]] for b in range(n))

    return pl.BlockSpec(src_block_shape, src_index_map)


def pallas_permute(x, perm):
    """Equivalent of torch.Tensor.permute(*perm) as a Pallas TPU kernel."""
    ndim = x.ndim
    perm = tuple(int(p) if int(p) >= 0 else int(p) + ndim for p in perm)
    assert sorted(perm) == list(range(ndim)), "perm must be a permutation of the axes"
    if ndim <= 1 or perm == tuple(range(ndim)):
        return x                           # identity permutation: pure relabeling

    out_shape = tuple(int(x.shape[p]) for p in perm)
    g_in_shape, g_perm = _group_axes(tuple(int(s) for s in x.shape), perm)
    g_out_shape = tuple(g_in_shape[p] for p in g_perm)
    dtype_name = jnp.dtype(x.dtype).name
    itemsize = jnp.dtype(x.dtype).itemsize
    total_bytes = int(math.prod(g_in_shape)) * itemsize
    vmem_cap = _vmem_capacity_bytes()

    xg = x.reshape(g_in_shape)             # free row-major relabel -> lane-dense loads

    # ---- Gridded, pipelined copy for anything beyond "tiny". ----
    if total_bytes > _SMALL_BYTES:
        j = g_perm[0]                      # input group that becomes output group 0
        G = g_in_shape[j]
        per_item = total_bytes // G
        item_shape = g_out_shape[1:]
        item_view = _dense_view(item_shape)
        align = _bn_alignment(len(g_in_shape), j, item_view)
        bn = _pick_bn(G, per_item, align, vmem_cap)
        if bn is not None:
            steps = G // bn
            slab = bn * per_item
            vmem_limit = int(min(max(4 * slab + (2 << 20), 16 << 20),
                                 vmem_cap - (8 << 20)))
            if item_view != item_shape and not _merged_store_lowers(
                    "tiled", g_in_shape, dtype_name, g_perm, item_view,
                    bn, steps, vmem_limit):
                item_view = item_shape     # un-merged (possibly masked) store layout
            fn, _ = _build_tiled(g_in_shape, x.dtype, g_perm, item_view,
                                 bn, steps, vmem_limit)
            return fn(xg).reshape(out_shape)

    # ---- Tiny (or un-tileable) input: one block, no grid.  No double
    #      buffering here, so budget 2x (in + out) plus headroom. ----
    vmem_limit = None
    if 2 * total_bytes + (4 << 20) > (16 << 20):
        # TODO(synk): inputs too large for a single block *and* with no legal
        # tiling along the leading output group are not further subdivided.
        vmem_limit = int(min(2 * total_bytes + (4 << 20), vmem_cap - (8 << 20)))
    out_view = _dense_view(g_out_shape)
    if out_view != g_out_shape and not _merged_store_lowers(
            "single", g_in_shape, dtype_name, g_perm, out_view, 0, 0, vmem_limit):
        out_view = g_out_shape
    fn = _build_single(g_in_shape, x.dtype, g_perm, out_view, vmem_limit)
    return fn(xg).reshape(out_shape)


if __name__ == "__main__":
    # NCHW conv-style tensor, Permute(0, 2, 3, 1): NCHW -> NHWC.
    x = jax.random.normal(jax.random.PRNGKey(0), (2, 4, 16, 16), dtype=jnp.float32)
    perm = (0, 2, 3, 1)
    out = jax.block_until_ready(pallas_permute(x, perm))
    ref = jnp.transpose(x, perm)
    assert out.shape == ref.shape and out.dtype == ref.dtype
    assert jnp.array_equal(out, ref), "permute mismatch vs reference (case 1)"

    # A permutation that moves the leading axis (transpose-only store path).
    x2 = jax.random.normal(jax.random.PRNGKey(1), (8, 16, 32), dtype=jnp.float32)
    out2 = jax.block_until_ready(pallas_permute(x2, (2, 0, 1)))
    assert jnp.array_equal(out2, jnp.transpose(x2, (2, 0, 1))), "mismatch (case 2)"

    # A larger input that takes the gridded, double-buffered path.
    x3 = jax.random.normal(jax.random.PRNGKey(2), (64, 8, 32, 32), dtype=jnp.float32)
    out3 = jax.block_until_ready(pallas_permute(x3, (0, 2, 3, 1)))
    assert jnp.array_equal(out3, jnp.transpose(x3, (0, 2, 3, 1))), "mismatch (case 3)"

    print("KERNEL_OK")
</pallas_src>

<mosaic_0001>
module attributes {stable_mosaic.version = 11 : i64} {
  func.func @_permute_kernel(%arg0: memref<2x4x256xf32, #tpu.memory_space<vmem>>, %arg1: memref<2x256x4xf32, #tpu.memory_space<vmem>>) attributes {dimension_semantics = [], scalar_prefetch = 0 : i64, scratch_operands = 0 : i64, tpu.core_type = #tpu.core_type<tc>} {
    %c0 = arith.constant 0 : index
    %c0_0 = arith.constant 0 : index
    %c0_1 = arith.constant 0 : index
    %0 = vector.load %arg0[%c0, %c0_0, %c0_1] : memref<2x4x256xf32, #tpu.memory_space<vmem>>, vector<2x4x256xf32>
    %1 = tpu.transpose %0, [0, 2, 1] : vector<2x4x256xf32> -> vector<2x256x4xf32>
    %c0_2 = arith.constant 0 : index
    %c0_3 = arith.constant 0 : index
    %c0_4 = arith.constant 0 : index
    %2 = vector.load %arg1[%c0_2, %c0_3, %c0_4] : memref<2x256x4xf32, #tpu.memory_space<vmem>>, vector<2x256x4xf32>
    tpu.vector_store %arg1[%c0_2, %c0_3, %c0_4], %1 {strides = array<i32>} : memref<2x256x4xf32, #tpu.memory_space<vmem>>, vector<2x256x4xf32>,
    return
  }
}

</mosaic_0001>

<llo_original>
// kernel: tpu_custom_call.1
$region0: #{tpu_custom_call.1}
  #allocation0 [shape = 'u32[]', space=smem, size = 0x4, offset = 0x4, fixed_abs, tag = 'smem constant byte address 0x4 - core index']
  #allocation1 [shape = 'u32[144,128]{1,0:T(1,128)}', space=vmem, size = 0x12000, scoped, tag = 'internal scratch']
  %s0 = inlined_call_operand.hbm [shape: f32[2,4,256], index: 0, kind: input, shape index: {}]
  %s1 = inlined_call_operand.vmem [shape: f32[2,256,4], index: 1, kind: output, shape index: {}]
  %s2 = sld [smem:[#allocation0]]
  $region18: #{tpu_custom_call.1} parent=0
    _
  %s4 = ssub.s32 1, %s2
  %s5 = scalar_select 0, %s4, %s2
  $region1: #{tpu_custom_call.1} parent=0
    #allocation2 [shape = 'u8[8192]{0}', space=vmem, size = 0x2000, scoped, tag = 'input window, operand 0, single buffered']
    #allocation3 [shape = 's32[1]{0}', space=sflag, size = 0x4, scoped, tag = 'scoped memory for tpu_custom_call.1']
    %6 = vsyncpa [#allocation3], 0
    // Predicated region
    $region2: #{tpu_custom_call.1} parent=1 // pred_check
      _
    $region3: #{tpu_custom_call.1} parent=1 // pred_check_branch
      %8 = sbr.rel (0) target = $region5
    $region4: #{tpu_custom_call.1} parent=1 // pred_region
      %s10 = ssub.s32 256, 256
      %11 = vsyncadd [#allocation3], %s10
      %s12 = sshll.u32 [#allocation2], 4
      %s13 = int_to_ptr.vmem [resolvable:$true] %s12
      %18 = dma.hbm_to_vmem [thread:$0]  %s0, 256, %s13, [#allocation3], 128, 128, 8
    $region5: #{tpu_custom_call.1} parent=1 // pred_fallthru
      _
    // Predicated region
    $region6: #{tpu_custom_call.1} parent=1 // pred_check
      _
    $region7: #{tpu_custom_call.1} parent=1 // pred_check_branch
      %20 = sbr.rel (0) target = $region9
    $region8: #{tpu_custom_call.1} parent=1 // pred_region
      %21 = dma.done [#allocation3], 256
    $region9: #{tpu_custom_call.1} parent=1 // pred_fallthru
      _
    %v22 = vld [vmem:[#allocation2] sm:$0xff]
    %v23 = vld [vmem:[#allocation2 + $0x8] sm:$0xff]
    %v26 = vcombine.high %v22, %v22
    %v27 = vcombine.high %v23, %v23
    %30 = vxpose.xlu0.b32.start [1/16] %v22, 128
    %31 = vxpose.xlu0.b32.cont [2/16] 0.0, 128
    %32 = vxpose.xlu0.b32.cont [3/16] 0.0, 128
    %33 = vxpose.xlu0.b32.cont [4/16] 0.0, 128
    %34 = vxpose.xlu0.b32.cont [5/16] 0.0, 128
    %35 = vxpose.xlu0.b32.cont [6/16] 0.0, 128
    %36 = vxpose.xlu0.b32.cont [7/16] 0.0, 128
    %37 = vxpose.xlu0.b32.cont [8/16] 0.0, 128
    %38 = vxpose.xlu0.b32.cont [9/16] 0.0, 128
    %39 = vxpose.xlu0.b32.cont [10/16] 0.0, 128
    %40 = vxpose.xlu0.b32.cont [11/16] 0.0, 128
    %41 = vxpose.xlu0.b32.cont [12/16] 0.0, 128
    %42 = vxpose.xlu0.b32.cont [13/16] 0.0, 128
    %43 = vxpose.xlu0.b32.cont [14/16] 0.0, 128
    %44 = vxpose.xlu0.b32.cont [15/16] 0.0, 128
    %45 = vxpose.xlu0.b32.end [16/16] 0.0, 128
    %v46 = vpop.trf.xlu0
    %v47 = vpop.trf.xlu0
    %v48 = vpop.trf.xlu0
    %v49 = vpop.trf.xlu0
    %v50 = vpop.trf.xlu0
    %v51 = vpop.trf.xlu0
    %v52 = vpop.trf.xlu0
    %v53 = vpop.trf.xlu0
    %v54 = vpop.trf.xlu0
    %v55 = vpop.trf.xlu0
    %v56 = vpop.trf.xlu0
    %v57 = vpop.trf.xlu0
    %v58 = vpop.trf.xlu0
    %v59 = vpop.trf.xlu0
    %v60 = vpop.trf.xlu0
    %v61 = vpop.trf.xlu0
    %62 = vxpose.xlu0.b32.start [1/16] %v26, 128
    %63 = vxpose.xlu0.b32.cont [2/16] 0.0, 128
    %64 = vxpose.xlu0.b32.cont [3/16] 0.0, 128
    %65 = vxpose.xlu0.b32.cont [4/16] 0.0, 128
    %66 = vxpose.xlu0.b32.cont [5/16] 0.0, 128
    %67 = vxpose.xlu0.b32.cont [6/16] 0.0, 128
    %68 = vxpose.xlu0.b32.cont [7/16] 0.0, 128
    %69 = vxpose.xlu0.b32.cont [8/16] 0.0, 128
    %70 = vxpose.xlu0.b32.cont [9/16] 0.0, 128
    %71 = vxpose.xlu0.b32.cont [10/16] 0.0, 128
    %72 = vxpose.xlu0.b32.cont [11/16] 0.0, 128
    %73 = vxpose.xlu0.b32.cont [12/16] 0.0, 128
    %74 = vxpose.xlu0.b32.cont [13/16] 0.0, 128
    %75 = vxpose.xlu0.b32.cont [14/16] 0.0, 128
    %76 = vxpose.xlu0.b32.cont [15/16] 0.0, 128
    %77 = vxpose.xlu0.b32.end [16/16] 0.0, 128
    %v78 = vpop.trf.xlu0
    %v79 = vpop.trf.xlu0
    %v80 = vpop.trf.xlu0
    %v81 = vpop.trf.xlu0
    %v82 = vpop.trf.xlu0
    %v83 = vpop.trf.xlu0
    %v84 = vpop.trf.xlu0
    %v85 = vpop.trf.xlu0
    %v86 = vpop.trf.xlu0
    %v87 = vpop.trf.xlu0
    %v88 = vpop.trf.xlu0
    %v89 = vpop.trf.xlu0
    %v90 = vpop.trf.xlu0
    %v91 = vpop.trf.xlu0
    %v92 = vpop.trf.xlu0
    %v93 = vpop.trf.xlu0
    %94 = vxpose.xlu0.b32.start [1/16] %v23, 128
    %95 = vxpose.xlu0.b32.cont [2/16] 0.0, 128
    %96 = vxpose.xlu0.b32.cont [3/16] 0.0, 128
    %97 = vxpose.xlu0.b32.cont [4/16] 0.0, 128
    %98 = vxpose.xlu0.b32.cont [5/16] 0.0, 128
    %99 = vxpose.xlu0.b32.cont [6/16] 0.0, 128
    %100 = vxpose.xlu0.b32.cont [7/16] 0.0, 128
    %101 = vxpose.xlu0.b32.cont [8/16] 0.0, 128
    %102 = vxpose.xlu0.b32.cont [9/16] 0.0, 128
    %103 = vxpose.xlu0.b32.cont [10/16] 0.0, 128
    %104 = vxpose.xlu0.b32.cont [11/16] 0.0, 128
    %105 = vxpose.xlu0.b32.cont [12/16] 0.0, 128
    %106 = vxpose.xlu0.b32.cont [13/16] 0.0, 128
    %107 = vxpose.xlu0.b32.cont [14/16] 0.0, 128
    %108 = vxpose.xlu0.b32.cont [15/16] 0.0, 128
    %109 = vxpose.xlu0.b32.end [16/16] 0.0, 128
    %v110 = vpop.trf.xlu0
    %v111 = vpop.trf.xlu0
    %v112 = vpop.trf.xlu0
    %v113 = vpop.trf.xlu0
    %v114 = vpop.trf.xlu0
    %v115 = vpop.trf.xlu0
    %v116 = vpop.trf.xlu0
    %v117 = vpop.trf.xlu0
    %v118 = vpop.trf.xlu0
    %v119 = vpop.trf.xlu0
    %v120 = vpop.trf.xlu0
    %v121 = vpop.trf.xlu0
    %v122 = vpop.trf.xlu0
    %v123 = vpop.trf.xlu0
    %v124 = vpop.trf.xlu0
    %v125 = vpop.trf.xlu0
    %126 = vxpose.xlu0.b32.start [1/16] %v27, 128
    %127 = vxpose.xlu0.b32.cont [2/16] 0.0, 128
    %128 = vxpose.xlu0.b32.cont [3/16] 0.0, 128
    %129 = vxpose.xlu0.b32.cont [4/16] 0.0, 128
    %130 = vxpose.xlu0.b32.cont [5/16] 0.0, 128
    %131 = vxpose.xlu0.b32.cont [6/16] 0.0, 128
    %132 = vxpose.xlu0.b32.cont [7/16] 0.0, 128
    %133 = vxpose.xlu0.b32.cont [8/16] 0.0, 128
    %134 = vxpose.xlu0.b32.cont [9/16] 0.0, 128
    %135 = vxpose.xlu0.b32.cont [10/16] 0.0, 128
    %136 = vxpose.xlu0.b32.cont [11/16] 0.0, 128
    %137 = vxpose.xlu0.b32.cont [12/16] 0.0, 128
    %138 = vxpose.xlu0.b32.cont [13/16] 0.0, 128
    %139 = vxpose.xlu0.b32.cont [14/16] 0.0, 128
    %140 = vxpose.xlu0.b32.cont [15/16] 0.0, 128
    %141 = vxpose.xlu0.b32.end [16/16] 0.0, 128
    %v142 = vpop.trf.xlu0
    %v143 = vpop.trf.xlu0
    %v144 = vpop.trf.xlu0
    %v145 = vpop.trf.xlu0
    %v146 = vpop.trf.xlu0
    %v147 = vpop.trf.xlu0
    %v148 = vpop.trf.xlu0
    %v149 = vpop.trf.xlu0
    %v150 = vpop.trf.xlu0
    %v151 = vpop.trf.xlu0
    %v152 = vpop.trf.xlu0
    %v153 = vpop.trf.xlu0
    %v154 = vpop.trf.xlu0
    %v155 = vpop.trf.xlu0
    %v156 = vpop.trf.xlu0
    %v157 = vpop.trf.xlu0
    %vm158 = vcmask 31744
    %159 = vst.msk [vmem:[%s1] sm:$0xff] %vm158, %v46
    %160 = vst.msk [vmem:[%s1 + $0x8] sm:$0xff] %vm158, %v47
    %161 = vst.msk [vmem:[%s1 + $0x10] sm:$0xff] %vm158, %v48
    %162 = vst.msk [vmem:[%s1 + $0x18] sm:$0xff] %vm158, %v49
    %163 = vst.msk [vmem:[%s1 + $0x20] sm:$0xff] %vm158, %v50
    %164 = vst.msk [vmem:[%s1 + $0x28] sm:$0xff] %vm158, %v51
    %165 = vst.msk [vmem:[%s1 + $0x30] sm:$0xff] %vm158, %v52
    %166 = vst.msk [vmem:[%s1 + $0x38] sm:$0xff] %vm158, %v53
    %167 = vst.msk [vmem:[%s1 + $0x40] sm:$0xff] %vm158, %v54
    %168 = vst.msk [vmem:[%s1 + $0x48] sm:$0xff] %vm158, %v55
    %169 = vst.msk [vmem:[%s1 + $0x50] sm:$0xff] %vm158, %v56
    %170 = vst.msk [vmem:[%s1 + $0x58] sm:$0xff] %vm158, %v57
    %171 = vst.msk [vmem:[%s1 + $0x60] sm:$0xff] %vm158, %v58
    %172 = vst.msk [vmem:[%s1 + $0x68] sm:$0xff] %vm158, %v59
    %173 = vst.msk [vmem:[%s1 + $0x70] sm:$0xff] %vm158, %v60
    %174 = vst.msk [vmem:[%s1 + $0x78] sm:$0xff] %vm158, %v61
    %175 = vst.msk [vmem:[%s1 + $0x80] sm:$0xff] %vm158, %v78
    %176 = vst.msk [vmem:[%s1 + $0x88] sm:$0xff] %vm158, %v79
    %177 = vst.msk [vmem:[%s1 + $0x90] sm:$0xff] %vm158, %v80
    %178 = vst.msk [vmem:[%s1 + $0x98] sm:$0xff] %vm158, %v81
    %179 = vst.msk [vmem:[%s1 + $0xa0] sm:$0xff] %vm158, %v82
    %180 = vst.msk [vmem:[%s1 + $0xa8] sm:$0xff] %vm158, %v83
    %181 = vst.msk [vmem:[%s1 + $0xb0] sm:$0xff] %vm158, %v84
    %182 = vst.msk [vmem:[%s1 + $0xb8] sm:$0xff] %vm158, %v85
    %183 = vst.msk [vmem:[%s1 + $0xc0] sm:$0xff] %vm158, %v86
    %184 = vst.msk [vmem:[%s1 + $0xc8] sm:$0xff] %vm158, %v87
    %185 = vst.msk [vmem:[%s1 + $0xd0] sm:$0xff] %vm158, %v88
    %186 = vst.msk [vmem:[%s1 + $0xd8] sm:$0xff] %vm158, %v89
    %187 = vst.msk [vmem:[%s1 + $0xe0] sm:$0xff] %vm158, %v90
    %188 = vst.msk [vmem:[%s1 + $0xe8] sm:$0xff] %vm158, %v91
    %189 = vst.msk [vmem:[%s1 + $0xf0] sm:$0xff] %vm158, %v92
    %190 = vst.msk [vmem:[%s1 + $0xf8] sm:$0xff] %vm158, %v93
    %191 = vst.msk [vmem:[%s1 + $0x100] sm:$0xff] %vm158, %v110
    %192 = vst.msk [vmem:[%s1 + $0x108] sm:$0xff] %vm158, %v111
    %193 = vst.msk [vmem:[%s1 + $0x110] sm:$0xff] %vm158, %v112
    %194 = vst.msk [vmem:[%s1 + $0x118] sm:$0xff] %vm158, %v113
    %195 = vst.msk [vmem:[%s1 + $0x120] sm:$0xff] %vm158, %v114
    %196 = vst.msk [vmem:[%s1 + $0x128] sm:$0xff] %vm158, %v115
    %197 = vst.msk [vmem:[%s1 + $0x130] sm:$0xff] %vm158, %v116
    %198 = vst.msk [vmem:[%s1 + $0x138] sm:$0xff] %vm158, %v117
    %199 = vst.msk [vmem:[%s1 + $0x140] sm:$0xff] %vm158, %v118
    %200 = vst.msk [vmem:[%s1 + $0x148] sm:$0xff] %vm158, %v119
    %201 = vst.msk [vmem:[%s1 + $0x150] sm:$0xff] %vm158, %v120
    %202 = vst.msk [vmem:[%s1 + $0x158] sm:$0xff] %vm158, %v121
    %203 = vst.msk [vmem:[%s1 + $0x160] sm:$0xff] %vm158, %v122
    %204 = vst.msk [vmem:[%s1 + $0x168] sm:$0xff] %vm158, %v123
    %205 = vst.msk [vmem:[%s1 + $0x170] sm:$0xff] %vm158, %v124
    %206 = vst.msk [vmem:[%s1 + $0x178] sm:$0xff] %vm158, %v125
    %207 = vst.msk [vmem:[%s1 + $0x180] sm:$0xff] %vm158, %v142
    %208 = vst.msk [vmem:[%s1 + $0x188] sm:$0xff] %vm158, %v143
    %209 = vst.msk [vmem:[%s1 + $0x190] sm:$0xff] %vm158, %v144
    %210 = vst.msk [vmem:[%s1 + $0x198] sm:$0xff] %vm158, %v145
    %211 = vst.msk [vmem:[%s1 + $0x1a0] sm:$0xff] %vm158, %v146
    %212 = vst.msk [vmem:[%s1 + $0x1a8] sm:$0xff] %vm158, %v147
    %213 = vst.msk [vmem:[%s1 + $0x1b0] sm:$0xff] %vm158, %v148
    %214 = vst.msk [vmem:[%s1 + $0x1b8] sm:$0xff] %vm158, %v149
    %215 = vst.msk [vmem:[%s1 + $0x1c0] sm:$0xff] %vm158, %v150
    %216 = vst.msk [vmem:[%s1 + $0x1c8] sm:$0xff] %vm158, %v151
    %217 = vst.msk [vmem:[%s1 + $0x1d0] sm:$0xff] %vm158, %v152
    %218 = vst.msk [vmem:[%s1 + $0x1d8] sm:$0xff] %vm158, %v153
    %219 = vst.msk [vmem:[%s1 + $0x1e0] sm:$0xff] %vm158, %v154
    %220 = vst.msk [vmem:[%s1 + $0x1e8] sm:$0xff] %vm158, %v155
    %221 = vst.msk [vmem:[%s1 + $0x1f0] sm:$0xff] %vm158, %v156
    %222 = vst.msk [vmem:[%s1 + $0x1f8] sm:$0xff] %vm158, %v157
    // Predicated region
    $region10: #{tpu_custom_call.1} parent=1 // pred_check
      _
    $region11: #{tpu_custom_call.1} parent=1 // pred_check_branch
      %224 = sbr.rel (0) target = $region13
    $region12: #{tpu_custom_call.1} parent=1 // pred_region
      _
    $region13: #{tpu_custom_call.1} parent=1 // pred_fallthru
      _
    // Predicated region
    $region14: #{tpu_custom_call.1} parent=1 // pred_check
      _
    $region15: #{tpu_custom_call.1} parent=1 // pred_check_branch
      %226 = sbr.rel (0) target = $region17
    $region16: #{tpu_custom_call.1} parent=1 // pred_region
      _
    $region17: #{tpu_custom_call.1} parent=1 // pred_fallthru
      _
    %227 = vsyncpa [#allocation3], 1

</llo_original>
